<compile_context>
chip_gen: v7x
topology: tpu7x:2x2x1
jax: 0.10.0
libtpu: 0.0.40
codegen_flags: <defaults>
</compile_context>

<pallas_src>
import functools

import jax
import jax.numpy as jnp
from jax import lax
from jax.experimental import pallas as pl
from jax.experimental.pallas import tpu as pltpu


def _round_up(x, m):
    return (x + m - 1) // m * m


# ----------------------------------------------------------------------------
# Kernel: one grid step = `nb` images.
#   x_ref   : (nb*p_pad*pool^2, K)    im2col rows, ordered (img, out_pixel, window elem)
#   w_ref   : (K, cpad)               folded conv weights, K = Cin*KH*KW, Cout padded to 128
#   b_ref   : (1, cpad)               f32 bias
#   o_ref   : (nb*p_pad, cpad)        pooled output rows, ordered (img, out_pixel)
#   act_ref : (nb*p_pad*pool^2, cpad) f32 VMEM scratch holding conv + bias + ReLU
# ----------------------------------------------------------------------------
def conv_relu_pool_kernel(x_ref, w_ref, b_ref, o_ref, act_ref, *, nb, p_pad, pool):
    # Conv: every (kh, kw) tap folded into a single MXU contraction with K = Cin*KH*KW,
    # f32 accumulation.
    acc = jnp.dot(x_ref[...], w_ref[...], preferred_element_type=jnp.float32)

    # Bias + ReLU in f32, parked in VMEM scratch so the pool can re-read it strided.
    act_ref[...] = jnp.maximum(acc + b_ref[...], 0.0)

    # pool x pool max-pool: the pool^2 window elements of each output pixel occupy
    # consecutive scratch rows, so the whole pool is pool^2 bulk strided reads + maxima
    # and one dense store (nb*p_pad is a multiple of 8 -> unmasked vst).
    pp = pool * pool
    n_out = nb * p_pad
    pooled = act_ref[pl.ds(0, n_out, stride=pp), :]
    for t in range(1, pp):
        pooled = jnp.maximum(pooled, act_ref[pl.ds(t, n_out, stride=pp), :])
    o_ref[...] = pooled.astype(o_ref.dtype)


# ----------------------------------------------------------------------------
# Jitted implementation (all tiling config is static).
# ----------------------------------------------------------------------------
@functools.partial(jax.jit, static_argnames=("kernel_size", "pool", "compute_dtype",
                                             "nb", "vmem_limit"))
def _conv2d_block_impl(x_nchw, weight, bias, *, kernel_size, pool, compute_dtype,
                       nb, vmem_limit):
    n, cin, h, w = x_nchw.shape
    cout = weight.shape[0]
    ksz = kernel_size
    hc, wc = h - ksz + 1, w - ksz + 1          # conv output size (stride 1, VALID)
    hp, wp = hc // pool, wc // pool            # floor-mode pooled output size
    cpad = _round_up(cout, 128)                # lane-dense MXU N dim / dense output stores
    k_dim = cin * ksz * ksz
    p_img = hp * wp                            # pooled pixels per image
    p_pad = _round_up(p_img, 8)                # sublane-aligned output rows per image
    n_pad = _round_up(n, nb)

    # Only conv outputs with h < hp*pool and w < wp*pool are materialized (exactly what
    # floor-mode MaxPool2d consumes), so no out-of-window conv values ever feed a result.
    assert hp >= 1 and wp >= 1 and pool * hp <= hc and pool * wp <= wc

    # --- full im2col in the wrapper: last HBM dim is K = Cin*KH*KW (lane-dense) ---------
    # NOTE: on the bf16 path the *inputs* are quantized to bf16 (inference-grade).
    x_nhwc = jnp.transpose(x_nchw, (0, 2, 3, 1)).astype(compute_dtype)    # (N, H, W, Cin)
    taps = [x_nhwc[:, kh:kh + hc, kw:kw + wc, :]
            for kh in range(ksz) for kw in range(ksz)]
    patches = jnp.concatenate(taps, axis=-1)                              # (N, hc, wc, K)
    # Keep only pooled-relevant conv positions, then block (h, w) by the pool window so
    # the pool^2 window elements of each output pixel become consecutive rows.
    patches = patches[:, :hp * pool, :wp * pool, :]
    patches = patches.reshape(n, hp, pool, wp, pool, k_dim)
    patches = jnp.transpose(patches, (0, 1, 3, 2, 4, 5))                  # (N,hp,wp,pool,pool,K)
    patches = patches.reshape(n, p_img, pool * pool, k_dim)               # (N, P, pool^2, K)
    # Zero-pad batch (-> multiple of nb) and pixels (-> multiple of 8); the padded rows
    # produce ReLU(bias) garbage that is sliced off below.
    patches = jnp.pad(patches, ((0, n_pad - n), (0, p_pad - p_img), (0, 0), (0, 0)))
    x_rows = patches.reshape(n_pad * p_pad * pool * pool, k_dim)

    # Weights: (Cout, Cin, KH, KW) -> (K, Cout_pad), K ordered (kh, kw, cin) to match taps.
    wmat = jnp.transpose(weight, (2, 3, 1, 0)).reshape(k_dim, cout)
    wmat = jnp.pad(wmat, ((0, 0), (0, cpad - cout))).astype(compute_dtype)
    bias_p = jnp.pad(bias.astype(jnp.float32), (0, cpad - cout)).reshape(1, cpad)

    rows_per_step = nb * p_pad * pool * pool
    out_rows_per_step = nb * p_pad
    kernel = functools.partial(conv_relu_pool_kernel, nb=nb, p_pad=p_pad, pool=pool)

    out = pl.pallas_call(
        kernel,
        out_shape=jax.ShapeDtypeStruct((n_pad * p_pad, cpad), jnp.float32),
        grid_spec=pltpu.PrefetchScalarGridSpec(
            num_scalar_prefetch=0,
            grid=(n_pad // nb,),
            in_specs=[
                pl.BlockSpec((rows_per_step, k_dim), lambda i: (i, 0)),
                pl.BlockSpec((k_dim, cpad), lambda i: (0, 0)),
                pl.BlockSpec((1, cpad), lambda i: (0, 0)),
            ],
            out_specs=pl.BlockSpec((out_rows_per_step, cpad), lambda i: (i, 0)),
            scratch_shapes=[pltpu.VMEM((rows_per_step, cpad), jnp.float32)],
        ),
        compiler_params=pltpu.CompilerParams(
            dimension_semantics=("parallel",),
            vmem_limit_bytes=vmem_limit),
    )(x_rows, wmat, bias_p)

    # Strip batch / pixel / Cout padding and restore NCHW.
    out = out.reshape(n_pad, p_pad, cpad)[:n, :p_img, :cout]
    out = out.reshape(n, hp, wp, cout)
    return jnp.transpose(out, (0, 3, 1, 2))


# ----------------------------------------------------------------------------
# Public wrapper: picks the per-generation static config (nb, vmem_limit).
# ----------------------------------------------------------------------------
def conv2d_block(x_nchw, weight, bias, *, kernel_size, pool=2,
                 compute_dtype=jnp.bfloat16):
    """Forward of Conv2dBlock: Conv2d(k, stride=1, pad=0) -> ReLU -> MaxPool2d(pool)."""
    n, cin, h, w = x_nchw.shape
    cout = weight.shape[0]
    ksz = int(kernel_size)
    pool = int(pool)
    hc, wc = h - ksz + 1, w - ksz + 1
    hp, wp = hc // pool, wc // pool
    assert hp >= 1 and wp >= 1, "input too small for conv + pool"

    cpad = _round_up(cout, 128)
    k_dim = cin * ksz * ksz
    p_pad = _round_up(hp * wp, 8)
    rows_img = p_pad * pool * pool

    # Per-generation VMEM budget: 128 MiB on v5e/v6e, 64 MiB per TensorCore on v7x.
    try:
        vmem_cap = int(pltpu.get_tpu_info().vmem_capacity_bytes)
    except Exception:
        vmem_cap = 64 * 1024 * 1024            # conservative default (v7x per-core)
    # Never request the whole physical VMEM (leave headroom for compiler scratch):
    # ~48 MiB on v7x, up to ~100 MiB on v5e/v6e.
    vmem_limit = int(max(32 << 20, min(vmem_cap - (16 << 20), 100 << 20)))

    comp_bytes = jnp.dtype(compute_dtype).itemsize
    per_img = (2 * rows_img * _round_up(k_dim, 128) * comp_bytes   # x block, 2 pipeline bufs
               + rows_img * cpad * 4                               # f32 activation scratch
               + 2 * p_pad * cpad * 4)                             # out block, 2 pipeline bufs
    step_budget = max(8 << 20, vmem_limit - (8 << 20))
    nb_budget = max(1, step_budget // per_img)
    nb_steps = max(1, n // 4)                  # keep >= 4 grid steps (>= 2 per v7x core)
    nb = int(max(1, min(nb_budget, nb_steps, n)))

    return _conv2d_block_impl(x_nchw, weight, bias, kernel_size=ksz, pool=pool,
                              compute_dtype=compute_dtype, nb=nb, vmem_limit=vmem_limit)


# ----------------------------------------------------------------------------
# Pure-JAX reference (correctness check).
# ----------------------------------------------------------------------------
def conv2d_block_ref(x_nchw, weight, bias, *, kernel_size, pool=2):
    conv = lax.conv_general_dilated(
        x_nchw, weight, window_strides=(1, 1), padding="VALID",
        dimension_numbers=("NCHW", "OIHW", "NCHW"))
    conv = conv + bias.reshape(1, -1, 1, 1)
    act = jnp.maximum(conv, 0.0)
    return lax.reduce_window(
        act, -jnp.inf, lax.max,
        window_dimensions=(1, 1, pool, pool),
        window_strides=(1, 1, pool, pool),
        padding="VALID")


if __name__ == "__main__":
    N, C_IN, C_OUT, H, W = 2, 4, 8, 16, 16
    KSIZE, POOL = 3, 2

    key = jax.random.PRNGKey(0)
    kx, kw_, kb = jax.random.split(key, 3)

    x = jax.random.normal(kx, (N, C_IN, H, W), dtype=jnp.float32)

    # Conv2d-style init: U(-sqrt(k), sqrt(k)), k = 1/(Cin*KH*KW)
    fan_in = C_IN * KSIZE * KSIZE
    bound = 1.0 / (fan_in ** 0.5)
    weight = jax.random.uniform(kw_, (C_OUT, C_IN, KSIZE, KSIZE),
                                dtype=jnp.float32, minval=-bound, maxval=bound)
    bias = jax.random.uniform(kb, (C_OUT,), dtype=jnp.float32,
                              minval=-bound, maxval=bound)

    expected_shape = (N, C_OUT, (H - KSIZE + 1) // POOL, (W - KSIZE + 1) // POOL)
    ref = conv2d_block_ref(x, weight, bias, kernel_size=KSIZE, pool=POOL)

    # f32 path: tight correctness check of the kernel logic.
    out_f32 = jax.block_until_ready(
        conv2d_block(x, weight, bias, kernel_size=KSIZE, pool=POOL,
                     compute_dtype=jnp.float32))
    assert out_f32.shape == ref.shape == expected_shape, out_f32.shape
    assert jnp.allclose(out_f32, ref, atol=1e-4, rtol=1e-4), \
        float(jnp.max(jnp.abs(out_f32 - ref)))

    # bf16 fast path (f32 accumulation): loose tolerance.
    out_bf16 = jax.block_until_ready(
        conv2d_block(x, weight, bias, kernel_size=KSIZE, pool=POOL,
                     compute_dtype=jnp.bfloat16))
    assert out_bf16.shape == expected_shape, out_bf16.shape
    assert jnp.allclose(out_bf16, ref, atol=5e-2, rtol=5e-2), \
        float(jnp.max(jnp.abs(out_bf16 - ref)))

    print("KERNEL_OK")
</pallas_src>

<mosaic_0001>
module attributes {stable_mosaic.version = 11 : i64} {
  func.func @conv_relu_pool_kernel(%arg0: i32, %arg1: memref<224x36xf32, #tpu.memory_space<vmem>>, %arg2: memref<36x128xf32, #tpu.memory_space<vmem>>, %arg3: memref<1x128xf32, #tpu.memory_space<vmem>>, %arg4: memref<56x128xf32, #tpu.memory_space<vmem>>, %arg5: memref<224x128xf32, #tpu.memory_space<vmem>>) attributes {dimension_semantics = [#tpu.dimension_semantics<parallel>], iteration_bounds = array<i64: 2>, scalar_prefetch = 0 : i64, scratch_operands = 1 : i64, tpu.core_type = #tpu.core_type<tc>, window_params = [{transform_indices = @transform_0, window_bounds = array<i64: 224, 36>}, {pipeline_mode = #tpu.pipeline_mode<synchronous>, transform_indices = @transform_1, window_bounds = array<i64: 36, 128>}, {pipeline_mode = #tpu.pipeline_mode<synchronous>, transform_indices = @transform_2, window_bounds = array<i64: 1, 128>}, {transform_indices = @transform_3, window_bounds = array<i64: 56, 128>}]} {
    %c0 = arith.constant 0 : index
    %c0_0 = arith.constant 0 : index
    %0 = vector.load %arg1[%c0, %c0_0] : memref<224x36xf32, #tpu.memory_space<vmem>>, vector<224x36xf32>
    %c0_1 = arith.constant 0 : index
    %c0_2 = arith.constant 0 : index
    %1 = vector.load %arg2[%c0_1, %c0_2] : memref<36x128xf32, #tpu.memory_space<vmem>>, vector<36x128xf32>
    %cst = arith.constant dense<0.000000e+00> : vector<224x128xf32>
    %2 = tpu.matmul %0, %1, %cst {dimension_numbers = #tpu.dot_dimension_numbers<[1], [0], [0], [1], [0, 0, 1, 1], [], []>} : vector<224x36xf32>, vector<36x128xf32>, vector<224x128xf32> -> vector<224x128xf32>
    %c0_3 = arith.constant 0 : index
    %c0_4 = arith.constant 0 : index
    %3 = vector.load %arg3[%c0_3, %c0_4] : memref<1x128xf32, #tpu.memory_space<vmem>>, vector<1x128xf32>
    %4 = vector.broadcast %3 : vector<1x128xf32> to vector<224x128xf32>
    %5 = arith.addf %2, %4 : vector<224x128xf32>
    %cst_5 = arith.constant 0.000000e+00 : f32
    %6 = vector.broadcast %cst_5 : f32 to vector<224x128xf32>
    %7 = arith.maximumf %5, %6 : vector<224x128xf32>
    %c0_6 = arith.constant 0 : index
    %c0_7 = arith.constant 0 : index
    %8 = vector.load %arg5[%c0_6, %c0_7] : memref<224x128xf32, #tpu.memory_space<vmem>>, vector<224x128xf32>
    tpu.vector_store %arg5[%c0_6, %c0_7], %7 {strides = array<i32>} : memref<224x128xf32, #tpu.memory_space<vmem>>, vector<224x128xf32>,
    %c0_8 = arith.constant 0 : index
    %c0_9 = arith.constant 0 : index
    %9 = tpu.strided_load %arg5[%c0_8, %c0_9] {strides = array<i32: 4, 1>} : memref<224x128xf32, #tpu.memory_space<vmem>>, vector<56x128xf32>
    %c1 = arith.constant 1 : index
    %c0_10 = arith.constant 0 : index
    %10 = tpu.strided_load %arg5[%c1, %c0_10] {strides = array<i32: 4, 1>} : memref<224x128xf32, #tpu.memory_space<vmem>>, vector<56x128xf32>
    %11 = arith.maximumf %9, %10 : vector<56x128xf32>
    %c2 = arith.constant 2 : index
    %c0_11 = arith.constant 0 : index
    %12 = tpu.strided_load %arg5[%c2, %c0_11] {strides = array<i32: 4, 1>} : memref<224x128xf32, #tpu.memory_space<vmem>>, vector<56x128xf32>
    %13 = arith.maximumf %11, %12 : vector<56x128xf32>
    %c3 = arith.constant 3 : index
    %c0_12 = arith.constant 0 : index
    %14 = tpu.strided_load %arg5[%c3, %c0_12] {strides = array<i32: 4, 1>} : memref<224x128xf32, #tpu.memory_space<vmem>>, vector<56x128xf32>
    %15 = arith.maximumf %13, %14 : vector<56x128xf32>
    %c0_13 = arith.constant 0 : index
    %c0_14 = arith.constant 0 : index
    %16 = vector.load %arg4[%c0_13, %c0_14] : memref<56x128xf32, #tpu.memory_space<vmem>>, vector<56x128xf32>
    tpu.vector_store %arg4[%c0_13, %c0_14], %15 {strides = array<i32>} : memref<56x128xf32, #tpu.memory_space<vmem>>, vector<56x128xf32>,
    return
  }
  func.func @transform_0(%arg0: i32) -> (i32, i32) {
    %c0_i32 = arith.constant 0 : i32
    %c0_i32_0 = arith.constant 0 : i32
    return %arg0, %c0_i32 : i32, i32
  }
  func.func @transform_1(%arg0: i32) -> (i32, i32) {
    %c0_i32 = arith.constant 0 : i32
    %c0_i32_0 = arith.constant 0 : i32
    %c0_i32_1 = arith.constant 0 : i32
    return %c0_i32, %c0_i32_0 : i32, i32
  }
  func.func @transform_2(%arg0: i32) -> (i32, i32) {
    %c0_i32 = arith.constant 0 : i32
    %c0_i32_0 = arith.constant 0 : i32
    %c0_i32_1 = arith.constant 0 : i32
    return %c0_i32, %c0_i32_0 : i32, i32
  }
  func.func @transform_3(%arg0: i32) -> (i32, i32) {
    %c0_i32 = arith.constant 0 : i32
    %c0_i32_0 = arith.constant 0 : i32
    return %arg0, %c0_i32 : i32, i32
  }
}

</mosaic_0001>

<llo_original>
// kernel: _conv2d_block_impl.1
$region0: #{_conv2d_block_impl.1}
  #allocation0 [shape = 'u32[]', space=smem, size = 0x4, offset = 0x4, fixed_abs, tag = 'smem constant byte address 0x4 - core index']
  #allocation1 [shape = 'u32[144,128]{1,0:T(1,128)}', space=vmem, size = 0x12000, scoped, tag = 'internal scratch']
  #allocation2 [shape = 'f32[224,128]{1,0:T(8,128)}', space=vmem, size = 0x1c000, scoped, tag = 'scratch operand']
  %s0 = inlined_call_operand.vmem [shape: f32[448,36], index: 0, kind: input, shape index: {}]
  %s1 = inlined_call_operand.vmem [shape: f32[36,128], index: 1, kind: input, shape index: {}]
  %s2 = inlined_call_operand.vmem [shape: f32[1,128], index: 2, kind: input, shape index: {}]
  %s3 = inlined_call_operand.vmem [shape: f32[112,128], index: 3, kind: output, shape index: {}]
  %s4 = sld [smem:[#allocation0]]
  $region45: #{_conv2d_block_impl.1} parent=0
    _
  %s6 = ssub.s32 1, %s4
  %s7 = scalar_select 0, %s6, %s4
  loop: start=0, step=1, limit=4
  $region2: #{_conv2d_block_impl.1} parent=0 // loop_pre_header
    _
  $region3: #{_conv2d_block_impl.1} parent=0 // loop_header
    %s9 = sphi 0, %s13
    %p10 = scmp.ge.s32.totalorder %s9, 4
    %s19 = sphi 0, %s21
    %s22 = sphi 0, %s19
    %s23 = sphi 0, %s22
    %s39 = sphi 0, %s23
    %s43 = sphi 0, %s43
    %s45 = sphi 0, %s43
    %s46 = sphi 0, %s45
    %s60 = sphi 0, %s46
    %s64 = sphi 0, %s64
    %s66 = sphi 0, %s64
    %s67 = sphi 0, %s66
    %s81 = sphi 0, %s67
    %s87 = sphi 0, %s89
    %s90 = sphi 0, %s87
    %s91 = sphi 0, %s90
    %s107 = sphi 0, %s91
  $region4: #{_conv2d_block_impl.1} parent=0 // loop_header_branch
    %12 = sbr.rel (%p10) target = $region8
  $region5: #{_conv2d_block_impl.1} parent=0 // loop_body
    %s14 = ssub.s32 %s9, 1
    %s15 = ssub.s32 %s9, 2
    %s16 = sadd.s32 %s9, 1
    %s17 = ssub.s32 %s9, %s16
    %p18 = scmp.eq.s32.totalorder %s17, 0
    %s20 = sadd.s32 %s19, 1
    %s21 = scalar_select %p18, %s19, %s20
    %p24 = pneg %p18
    %p25 = scmp.eq.s32.totalorder %s9, 1
    %p26 = por %p24, %p25
    %p27 = scmp.ne.s32.totalorder %s19, %s22
    %p28 = scmp.eq.s32.totalorder %s9, 0
    %p29 = por %p27, %p28
    %p30 = scmp.ne.s32.totalorder %s19, %s22
    %p31 = scmp.eq.s32.totalorder %s14, 1
    %p32 = por %p30, %p31
    %p33 = scmp.ne.s32.totalorder %s22, %s23
    %p34 = scmp.eq.s32.totalorder %s14, 0
    %p35 = por %p33, %p34
    %p36 = scmp.ne.s32.totalorder %s22, %s23
    %p37 = scmp.eq.s32.totalorder %s15, 1
    %p38 = por %p36, %p37
    %p40 = scmp.ne.s32.totalorder %s23, %s39
    %p41 = scmp.eq.s32.totalorder %s15, 0
    %p42 = por %p40, %p41
    %s44 = sadd.s32 %s43, 1
    %p47 = scmp.eq.s32.totalorder %s9, 1
    %p48 = scmp.ne.s32.totalorder %s43, %s45
    %p49 = scmp.eq.s32.totalorder %s9, 0
    %p50 = por %p48, %p49
    %p51 = scmp.ne.s32.totalorder %s43, %s45
    %p52 = scmp.eq.s32.totalorder %s14, 1
    %p53 = por %p51, %p52
    %p54 = scmp.ne.s32.totalorder %s45, %s46
    %p55 = scmp.eq.s32.totalorder %s14, 0
    %p56 = por %p54, %p55
    %p57 = scmp.ne.s32.totalorder %s45, %s46
    %p58 = scmp.eq.s32.totalorder %s15, 1
    %p59 = por %p57, %p58
    %p61 = scmp.ne.s32.totalorder %s46, %s60
    %p62 = scmp.eq.s32.totalorder %s15, 0
    %p63 = por %p61, %p62
    %s65 = sadd.s32 %s64, 1
    %p68 = scmp.eq.s32.totalorder %s9, 1
    %p69 = scmp.ne.s32.totalorder %s64, %s66
    %p70 = scmp.eq.s32.totalorder %s9, 0
    %p71 = por %p69, %p70
    %p72 = scmp.ne.s32.totalorder %s64, %s66
    %p73 = scmp.eq.s32.totalorder %s14, 1
    %p74 = por %p72, %p73
    %p75 = scmp.ne.s32.totalorder %s66, %s67
    %p76 = scmp.eq.s32.totalorder %s14, 0
    %p77 = por %p75, %p76
    %p78 = scmp.ne.s32.totalorder %s66, %s67
    %p79 = scmp.eq.s32.totalorder %s15, 1
    %p80 = por %p78, %p79
    %p82 = scmp.ne.s32.totalorder %s67, %s81
    %p83 = scmp.eq.s32.totalorder %s15, 0
    %p84 = por %p82, %p83
    %s85 = ssub.s32 %s9, %s16
    %p86 = scmp.eq.s32.totalorder %s85, 0
    %s88 = sadd.s32 %s87, 1
    %s89 = scalar_select %p86, %s87, %s88
    %p92 = pneg %p86
    %p93 = scmp.eq.s32.totalorder %s9, 1
    %p94 = por %p92, %p93
    %p95 = scmp.ne.s32.totalorder %s87, %s90
    %p96 = scmp.eq.s32.totalorder %s9, 0
    %p97 = por %p95, %p96
    %p98 = scmp.ne.s32.totalorder %s87, %s90
    %p99 = scmp.eq.s32.totalorder %s14, 1
    %p100 = por %p98, %p99
    %p101 = scmp.ne.s32.totalorder %s90, %s91
    %p102 = scmp.eq.s32.totalorder %s14, 0
    %p103 = por %p101, %p102
    %p104 = scmp.ne.s32.totalorder %s90, %s91
    %p105 = scmp.eq.s32.totalorder %s15, 1
    %p106 = por %p104, %p105
    %p108 = scmp.ne.s32.totalorder %s91, %s107
    %p109 = scmp.eq.s32.totalorder %s15, 0
    %p110 = por %p108, %p109
    %p111 = scmp.le.s32.totalorder 1, %s9
    %p112 = scmp.lt.s32.totalorder %s9, 3
    %p113 = pnand %p111, %p112
    %p114 = pneg %p113
    // Predicated region
    $region9: #{_conv2d_block_impl.1} parent=5 // pred_check
      _
    $region10: #{_conv2d_block_impl.1} parent=5 // pred_check_branch
      %116 = sbr.rel (%p113) target = $region12
    $region11: #{_conv2d_block_impl.1} parent=5 // pred_region
      %s117 = ssub.s32 %s9, 1
      // Predicated region
      $region13: #{_conv2d_block_impl.1} parent=11 // pred_check
        %p118 = pneg %p56
      $region14: #{_conv2d_block_impl.1} parent=11 // pred_check_branch
        %120 = sbr.rel (%p118) target = $region16
      $region15: #{_conv2d_block_impl.1} parent=11 // pred_region
        _
      $region16: #{_conv2d_block_impl.1} parent=11 // pred_fallthru
        _
      // Predicated region
      $region17: #{_conv2d_block_impl.1} parent=11 // pred_check
        %p121 = pneg %p77
      $region18: #{_conv2d_block_impl.1} parent=11 // pred_check_branch
        %123 = sbr.rel (%p121) target = $region20
      $region19: #{_conv2d_block_impl.1} parent=11 // pred_region
        _
      $region20: #{_conv2d_block_impl.1} parent=11 // pred_fallthru
        _
    $region12: #{_conv2d_block_impl.1} parent=5 // pred_fallthru
      _
    %p124 = scmp.lt.s32.totalorder %s9, 2
    // Predicated region
    $region21: #{_conv2d_block_impl.1} parent=5 // pred_check
      %p125 = pneg %p124
    $region22: #{_conv2d_block_impl.1} parent=5 // pred_check_branch
      %127 = sbr.rel (%p125) target = $region24
    $region23: #{_conv2d_block_impl.1} parent=5 // pred_region
      // Predicated region
      $region25: #{_conv2d_block_impl.1} parent=23 // pred_check
        %p128 = pneg %p29
      $region26: #{_conv2d_block_impl.1} parent=23 // pred_check_branch
        %130 = sbr.rel (%p128) target = $region28
      $region27: #{_conv2d_block_impl.1} parent=23 // pred_region
        %s131 = smul.u32 28, %s9
        %p132 = scmp.lt.s32.totalorder %s131, 55
        %s133 = scalar_select %p132, %s131, 55
        %s134 = smul.addr %s133, 8
        %s135 = scalar_lea.vmem %s0, %s134
        %s136 = smul.u32 28, %s9
      $region28: #{_conv2d_block_impl.1} parent=23 // pred_fallthru
        _
    $region24: #{_conv2d_block_impl.1} parent=5 // pred_fallthru
      _
    %p137 = scmp.le.s32.totalorder 1, %s9
    %p138 = scmp.lt.s32.totalorder %s9, 3
    %p139 = pnand %p137, %p138
    %p140 = pneg %p139
    // Predicated region
    $region29: #{_conv2d_block_impl.1} parent=5 // pred_check
      _
    $region30: #{_conv2d_block_impl.1} parent=5 // pred_check_branch
      %142 = sbr.rel (%p139) target = $region32
    $region31: #{_conv2d_block_impl.1} parent=5 // pred_region
      %s143 = ssub.s32 %s9, 1
      %s144 = smul.u32 28, %s14
      %p145 = scmp.lt.s32.totalorder %s144, 55
      %s146 = scalar_select %p145, %s144, 55
      %s147 = smul.addr %s146, 8
      %s148 = scalar_lea.vmem %s0, %s147
      %p149 = pneg %p35
      %p150 = pneg %p32
      %p151 = pneg %p56
      %p152 = pneg %p53
      %p153 = pneg %p77
      %p154 = pneg %p74
      %p155 = pneg %p103
      %p156 = pneg %p100
      %s157 = smul.u32 7, %s14
      %p158 = scmp.lt.s32.totalorder %s157, 13
      %s159 = scalar_select %p158, %s157, 13
      %s160 = smul.addr %s159, 8
      %s161 = scalar_lea.vmem %s3, %s160
      %s162 = smul.u32 28, %s14
      %p163 = scmp.lt.s32.totalorder %s162, 55
      %s164 = scalar_select %p163, %s162, 55
      %s165 = smul.addr %s164, 8
      %s166 = scalar_lea.vmem %s0, %s165
      %s167 = smul.u32 28, %s14
      %s168 = smul.u32 7, %s14
      %p169 = scmp.lt.s32.totalorder %s168, 13
      %s170 = scalar_select %p169, %s168, 13
      %s171 = smul.addr %s170, 8
      %s172 = scalar_lea.vmem %s3, %s171
      %s173 = smul.u32 7, %s14
      %v174 = vld [vmem:[%s166] sm:$0xff]
      %v175 = vld [vmem:[%s166 + $0x8] sm:$0xff]
      %v176 = vld [vmem:[%s166 + $0x10] sm:$0xff]
      %v177 = vld [vmem:[%s166 + $0x18] sm:$0xff]
      %v178 = vld [vmem:[%s166 + $0x20] sm:$0xff]
      %v179 = vld [vmem:[%s166 + $0x28] sm:$0xff]
      %v180 = vld [vmem:[%s166 + $0x30] sm:$0xff]
      %v181 = vld [vmem:[%s166 + $0x38] sm:$0xff]
      %v182 = vld [vmem:[%s166 + $0x40] sm:$0xff]
      %v183 = vld [vmem:[%s166 + $0x48] sm:$0xff]
      %v184 = vld [vmem:[%s166 + $0x50] sm:$0xff]
      %v185 = vld [vmem:[%s166 + $0x58] sm:$0xff]
      %v186 = vld [vmem:[%s166 + $0x60] sm:$0xff]
      %v187 = vld [vmem:[%s166 + $0x68] sm:$0xff]
      %v188 = vld [vmem:[%s166 + $0x70] sm:$0xff]
      %v189 = vld [vmem:[%s166 + $0x78] sm:$0xff]
      %v190 = vld [vmem:[%s166 + $0x80] sm:$0xff]
      %v191 = vld [vmem:[%s166 + $0x88] sm:$0xff]
      %v192 = vld [vmem:[%s166 + $0x90] sm:$0xff]
      %v193 = vld [vmem:[%s166 + $0x98] sm:$0xff]
      %v194 = vld [vmem:[%s166 + $0xa0] sm:$0xff]
      %v195 = vld [vmem:[%s166 + $0xa8] sm:$0xff]
      %v196 = vld [vmem:[%s166 + $0xb0] sm:$0xff]
      %v197 = vld [vmem:[%s166 + $0xb8] sm:$0xff]
      %v198 = vld [vmem:[%s166 + $0xc0] sm:$0xff]
      %v199 = vld [vmem:[%s166 + $0xc8] sm:$0xff]
      %v200 = vld [vmem:[%s166 + $0xd0] sm:$0xff]
      %v201 = vld [vmem:[%s166 + $0xd8] sm:$0xff]
      %v202 = vld [vmem:[%s1] sm:$0xff]
      %v203 = vld [vmem:[%s1 + $0x8] sm:$0xff]
      %v204 = vld [vmem:[%s1 + $0x10] sm:$0xff]
      %v205 = vld [vmem:[%s1 + $0x18] sm:$0xff]
      %v206 = vld [vmem:[%s1 + $0x20] sm:$0xf]
      %v207 = vld [vmem:[%s2] sm:$0x1]
      %v209 = vlaneseq
      %v210 = vshrl.u32 %v209, 7
      %v211 = vsub.s32 0, %v210
      %v212 = vrot.slane %v207, %v211
      %vm214 = vcmask 293888
      %v216 = vsel %vm214, %v174, 0
      %v219 = vsel %vm214, %v175, 0
      %v222 = vsel %vm214, %v176, 0
      %v225 = vsel %vm214, %v177, 0
      %v228 = vsel %vm214, %v178, 0
      %v231 = vsel %vm214, %v179, 0
      %v234 = vsel %vm214, %v180, 0
      %v237 = vsel %vm214, %v181, 0
      %v240 = vsel %vm214, %v182, 0
      %v243 = vsel %vm214, %v183, 0
      %v246 = vsel %vm214, %v184, 0
      %v249 = vsel %vm214, %v185, 0
      %v252 = vsel %vm214, %v186, 0
      %v255 = vsel %vm214, %v187, 0
      %v258 = vsel %vm214, %v188, 0
      %v261 = vsel %vm214, %v189, 0
      %v264 = vsel %vm214, %v190, 0
      %v267 = vsel %vm214, %v191, 0
      %v270 = vsel %vm214, %v192, 0
      %v273 = vsel %vm214, %v193, 0
      %v276 = vsel %vm214, %v194, 0
      %v279 = vsel %vm214, %v195, 0
      %v282 = vsel %vm214, %v196, 0
      %v285 = vsel %vm214, %v197, 0
      %v288 = vsel %vm214, %v198, 0
      %v291 = vsel %vm214, %v199, 0
      %v294 = vsel %vm214, %v200, 0
      %v297 = vsel %vm214, %v201, 0
      %vm299 = vcmask 1043456
      %v301 = vsel %vm299, %v206, 0
      %303 = vmatprep.subr.mxu0 0.0
      %304 = vmatpush1.msra.mxu0 %v202
      %305 = vmatprep.subr.mxu0 0.0
      %306 = vmatpush1.msra.mxu0 %v203
      %307 = vmatprep.subr.mxu0 0.0
      %308 = vmatpush1.msra.mxu0 %v204
      %309 = vmatprep.subr.mxu0 0.0
      %310 = vmatpush1.msra.mxu0 %v205
      %311 = vmatprep.subr.mxu0 0.0
      %312 = vmatpush1.msra.mxu0 %v301
      %313 = vmatprep.subr.mxu0 0.0
      %314 = vmatpush1.msra.mxu0 0.0
      %315 = vmatprep.subr.mxu0 0.0
      %316 = vmatpush1.msra.mxu0 0.0
      %317 = vmatprep.subr.mxu0 0.0
      %318 = vmatpush1.msra.mxu0 0.0
      %319 = vmatprep.subr.mxu0 0.0
      %320 = vmatpush1.msra.mxu0 0.0
      %321 = vmatprep.subr.mxu0 0.0
      %322 = vmatpush1.msra.mxu0 0.0
      %323 = vmatprep.subr.mxu0 0.0
      %324 = vmatpush1.msra.mxu0 0.0
      %325 = vmatprep.subr.mxu0 0.0
      %326 = vmatpush1.msra.mxu0 0.0
      %327 = vmatprep.subr.mxu0 0.0
      %328 = vmatpush1.msra.mxu0 0.0
      %329 = vmatprep.subr.mxu0 0.0
      %330 = vmatpush1.msra.mxu0 0.0
      %331 = vmatprep.subr.mxu0 0.0
      %332 = vmatpush1.msra.mxu0 0.0
      %333 = vmatprep.subr.mxu0 0.0
      %334 = vmatpush1.msra.mxu0 0.0
      %335 = vmatprep.subr.mxu0 0.0
      %336 = vmatpush1.msra.mxu0 0.0
      %337 = vmatprep.subr.mxu0 0.0
      %338 = vmatpush1.msra.mxu0 0.0
      %339 = vmatprep.subr.mxu0 0.0
      %340 = vmatpush1.msra.mxu0 0.0
      %341 = vmatprep.subr.mxu0 0.0
      %342 = vmatpush1.msra.mxu0 0.0
      %343 = vmatprep.subr.mxu0 0.0
      %344 = vmatpush1.msra.mxu0 0.0
      %345 = vmatprep.subr.mxu0 0.0
      %346 = vmatpush1.msra.mxu0 0.0
      %347 = vmatprep.subr.mxu0 0.0
      %348 = vmatpush1.msra.mxu0 0.0
      %349 = vmatprep.subr.mxu0 0.0
      %350 = vmatpush1.msra.mxu0 0.0
      %351 = vmatprep.subr.mxu0 0.0
      %352 = vmatpush1.msra.mxu0 0.0
      %353 = vmatprep.subr.mxu0 0.0
      %354 = vmatpush1.msra.mxu0 0.0
      %355 = vmatprep.subr.mxu0 0.0
      %356 = vmatpush1.msra.mxu0 0.0
      %357 = vmatprep.subr.mxu0 0.0
      %358 = vmatpush1.msra.mxu0 0.0
      %359 = vmatprep.subr.mxu0 0.0
      %360 = vmatpush1.msra.mxu0 0.0
      %361 = vmatprep.subr.mxu0 0.0
      %362 = vmatpush1.msra.mxu0 0.0
      %363 = vmatprep.subr.mxu0 0.0
      %364 = vmatpush1.msra.mxu0 0.0
      %365 = vmatprep.subr.mxu0 0.0
      %366 = vmatpush1.msra.mxu0 0.0
      %367 = vmatprep.mubr.f32.mxu0 0.0
      %368 = vmatmul.mubr.f32.gmra.mrb[0].mxu0 %v216
      %v369 = vpop.f32.mrb[0].mxu0
      %v370 = vadd.f32 %v212, %v369
      %v371 = vpop.f32.mrb[0].mxu0
      %372 = vmatprep.mubr.f32.mxu0 0.0
      %373 = vmatmul.mubr.f32.gmra.mrb[0].mxu0 %v219
      %v374 = vpop.f32.mrb[0].mxu0
      %v375 = vadd.f32 %v212, %v374
      %v376 = vpop.f32.mrb[0].mxu0
      %377 = vmatprep.mubr.f32.mxu0 0.0
      %378 = vmatmul.mubr.f32.gmra.mrb[0].mxu0 %v222
      %v379 = vpop.f32.mrb[0].mxu0
      %v380 = vadd.f32 %v212, %v379
      %v381 = vpop.f32.mrb[0].mxu0
      %382 = vmatprep.mubr.f32.mxu0 0.0
      %383 = vmatmul.mubr.f32.gmra.mrb[0].mxu0 %v225
      %v384 = vpop.f32.mrb[0].mxu0
      %v385 = vadd.f32 %v212, %v384
      %v386 = vpop.f32.mrb[0].mxu0
      %387 = vmatprep.mubr.f32.mxu0 0.0
      %388 = vmatmul.mubr.f32.gmra.mrb[0].mxu0 %v228
      %v389 = vpop.f32.mrb[0].mxu0
      %v390 = vadd.f32 %v212, %v389
      %v391 = vpop.f32.mrb[0].mxu0
      %392 = vmatprep.mubr.f32.mxu0 0.0
      %393 = vmatmul.mubr.f32.gmra.mrb[0].mxu0 %v231
      %v394 = vpop.f32.mrb[0].mxu0
      %v395 = vadd.f32 %v212, %v394
      %v396 = vpop.f32.mrb[0].mxu0
      %397 = vmatprep.mubr.f32.mxu0 0.0
      %398 = vmatmul.mubr.f32.gmra.mrb[0].mxu0 %v234
      %v399 = vpop.f32.mrb[0].mxu0
      %v400 = vadd.f32 %v212, %v399
      %v401 = vpop.f32.mrb[0].mxu0
      %402 = vmatprep.mubr.f32.mxu0 0.0
      %403 = vmatmul.mubr.f32.gmra.mrb[0].mxu0 %v237
      %v404 = vpop.f32.mrb[0].mxu0
      %v405 = vadd.f32 %v212, %v404
      %v406 = vpop.f32.mrb[0].mxu0
      %407 = vmatprep.mubr.f32.mxu0 0.0
      %408 = vmatmul.mubr.f32.gmra.mrb[0].mxu0 %v240
      %v409 = vpop.f32.mrb[0].mxu0
      %v410 = vadd.f32 %v212, %v409
      %v411 = vpop.f32.mrb[0].mxu0
      %412 = vmatprep.mubr.f32.mxu0 0.0
      %413 = vmatmul.mubr.f32.gmra.mrb[0].mxu0 %v243
      %v414 = vpop.f32.mrb[0].mxu0
      %v415 = vadd.f32 %v212, %v414
      %v416 = vpop.f32.mrb[0].mxu0
      %417 = vmatprep.mubr.f32.mxu0 0.0
      %418 = vmatmul.mubr.f32.gmra.mrb[0].mxu0 %v246
      %v419 = vpop.f32.mrb[0].mxu0
      %v420 = vadd.f32 %v212, %v419
      %v421 = vpop.f32.mrb[0].mxu0
      %422 = vmatprep.mubr.f32.mxu0 0.0
      %423 = vmatmul.mubr.f32.gmra.mrb[0].mxu0 %v249
      %v424 = vpop.f32.mrb[0].mxu0
      %v425 = vadd.f32 %v212, %v424
      %v426 = vpop.f32.mrb[0].mxu0
      %427 = vmatprep.mubr.f32.mxu0 0.0
      %428 = vmatmul.mubr.f32.gmra.mrb[0].mxu0 %v252
      %v429 = vpop.f32.mrb[0].mxu0
      %v430 = vadd.f32 %v212, %v429
      %v431 = vpop.f32.mrb[0].mxu0
      %432 = vmatprep.mubr.f32.mxu0 0.0
      %433 = vmatmul.mubr.f32.gmra.mrb[0].mxu0 %v255
      %v434 = vpop.f32.mrb[0].mxu0
      %v435 = vadd.f32 %v212, %v434
      %v436 = vpop.f32.mrb[0].mxu0
      %437 = vmatprep.mubr.f32.mxu0 0.0
      %438 = vmatmul.mubr.f32.gmra.mrb[0].mxu0 %v258
      %v439 = vpop.f32.mrb[0].mxu0
      %v440 = vadd.f32 %v212, %v439
      %v441 = vpop.f32.mrb[0].mxu0
      %442 = vmatprep.mubr.f32.mxu0 0.0
      %443 = vmatmul.mubr.f32.gmra.mrb[0].mxu0 %v261
      %v444 = vpop.f32.mrb[0].mxu0
      %v445 = vadd.f32 %v212, %v444
      %v446 = vpop.f32.mrb[0].mxu0
      %447 = vmatprep.mubr.f32.mxu0 0.0
      %448 = vmatmul.mubr.f32.gmra.mrb[0].mxu0 %v264
      %v449 = vpop.f32.mrb[0].mxu0
      %v450 = vadd.f32 %v212, %v449
      %v451 = vpop.f32.mrb[0].mxu0
      %452 = vmatprep.mubr.f32.mxu0 0.0
      %453 = vmatmul.mubr.f32.gmra.mrb[0].mxu0 %v267
      %v454 = vpop.f32.mrb[0].mxu0
      %v455 = vadd.f32 %v212, %v454
      %v456 = vpop.f32.mrb[0].mxu0
      %457 = vmatprep.mubr.f32.mxu0 0.0
      %458 = vmatmul.mubr.f32.gmra.mrb[0].mxu0 %v270
      %v459 = vpop.f32.mrb[0].mxu0
      %v460 = vadd.f32 %v212, %v459
      %v461 = vpop.f32.mrb[0].mxu0
      %462 = vmatprep.mubr.f32.mxu0 0.0
      %463 = vmatmul.mubr.f32.gmra.mrb[0].mxu0 %v273
      %v464 = vpop.f32.mrb[0].mxu0
      %v465 = vadd.f32 %v212, %v464
      %v466 = vpop.f32.mrb[0].mxu0
      %467 = vmatprep.mubr.f32.mxu0 0.0
      %468 = vmatmul.mubr.f32.gmra.mrb[0].mxu0 %v276
      %v469 = vpop.f32.mrb[0].mxu0
      %v470 = vadd.f32 %v212, %v469
      %v471 = vpop.f32.mrb[0].mxu0
      %472 = vmatprep.mubr.f32.mxu0 0.0
      %473 = vmatmul.mubr.f32.gmra.mrb[0].mxu0 %v279
      %v474 = vpop.f32.mrb[0].mxu0
      %v475 = vadd.f32 %v212, %v474
      %v476 = vpop.f32.mrb[0].mxu0
      %477 = vmatprep.mubr.f32.mxu0 0.0
      %478 = vmatmul.mubr.f32.gmra.mrb[0].mxu0 %v282
      %v479 = vpop.f32.mrb[0].mxu0
      %v480 = vadd.f32 %v212, %v479
      %v481 = vpop.f32.mrb[0].mxu0
      %482 = vmatprep.mubr.f32.mxu0 0.0
      %483 = vmatmul.mubr.f32.gmra.mrb[0].mxu0 %v285
      %v484 = vpop.f32.mrb[0].mxu0
      %v485 = vadd.f32 %v212, %v484
      %v486 = vpop.f32.mrb[0].mxu0
      %487 = vmatprep.mubr.f32.mxu0 0.0
      %488 = vmatmul.mubr.f32.gmra.mrb[0].mxu0 %v288
      %v489 = vpop.f32.mrb[0].mxu0
      %v490 = vadd.f32 %v212, %v489
      %v491 = vpop.f32.mrb[0].mxu0
      %492 = vmatprep.mubr.f32.mxu0 0.0
      %493 = vmatmul.mubr.f32.gmra.mrb[0].mxu0 %v291
      %v494 = vpop.f32.mrb[0].mxu0
      %v495 = vadd.f32 %v212, %v494
      %v496 = vpop.f32.mrb[0].mxu0
      %497 = vmatprep.mubr.f32.mxu0 0.0
      %498 = vmatmul.mubr.f32.gmra.mrb[0].mxu0 %v294
      %v499 = vpop.f32.mrb[0].mxu0
      %v500 = vadd.f32 %v212, %v499
      %v501 = vpop.f32.mrb[0].mxu0
      %502 = vmatprep.mubr.f32.mxu0 0.0
      %503 = vmatmul.mubr.f32.gmra.mrb[0].mxu0 %v297
      %v504 = vpop.f32.mrb[0].mxu0
      %v505 = vadd.f32 %v212, %v504
      %v506 = vpop.f32.mrb[0].mxu0
      %507 = vdwg.mxu0
      %v508 = vmax.f32 %v370, 0.0
      %v509 = vmax.f32 %v375, 0.0
      %v510 = vmax.f32 %v380, 0.0
      %v511 = vmax.f32 %v385, 0.0
      %v512 = vmax.f32 %v390, 0.0
      %v513 = vmax.f32 %v395, 0.0
      %v514 = vmax.f32 %v400, 0.0
      %v515 = vmax.f32 %v405, 0.0
      %v516 = vmax.f32 %v410, 0.0
      %v517 = vmax.f32 %v415, 0.0
      %v518 = vmax.f32 %v420, 0.0
      %v519 = vmax.f32 %v425, 0.0
      %v520 = vmax.f32 %v430, 0.0
      %v521 = vmax.f32 %v435, 0.0
      %v522 = vmax.f32 %v440, 0.0
      %v523 = vmax.f32 %v445, 0.0
      %v524 = vmax.f32 %v450, 0.0
      %v525 = vmax.f32 %v455, 0.0
      %v526 = vmax.f32 %v460, 0.0
      %v527 = vmax.f32 %v465, 0.0
      %v528 = vmax.f32 %v470, 0.0
      %v529 = vmax.f32 %v475, 0.0
      %v530 = vmax.f32 %v480, 0.0
      %v531 = vmax.f32 %v485, 0.0
      %v532 = vmax.f32 %v490, 0.0
      %v533 = vmax.f32 %v495, 0.0
      %v534 = vmax.f32 %v500, 0.0
      %v535 = vmax.f32 %v505, 0.0
      %536 = vst [vmem:[#allocation2] sm:$0xff] %v508
      %537 = vst [vmem:[#allocation2 + $0x8] sm:$0xff] %v509
      %538 = vst [vmem:[#allocation2 + $0x10] sm:$0xff] %v510
      %539 = vst [vmem:[#allocation2 + $0x18] sm:$0xff] %v511
      %540 = vst [vmem:[#allocation2 + $0x20] sm:$0xff] %v512
      %541 = vst [vmem:[#allocation2 + $0x28] sm:$0xff] %v513
      %542 = vst [vmem:[#allocation2 + $0x30] sm:$0xff] %v514
      %543 = vst [vmem:[#allocation2 + $0x38] sm:$0xff] %v515
      %544 = vst [vmem:[#allocation2 + $0x40] sm:$0xff] %v516
      %545 = vst [vmem:[#allocation2 + $0x48] sm:$0xff] %v517
      %546 = vst [vmem:[#allocation2 + $0x50] sm:$0xff] %v518
      %547 = vst [vmem:[#allocation2 + $0x58] sm:$0xff] %v519
      %548 = vst [vmem:[#allocation2 + $0x60] sm:$0xff] %v520
      %549 = vst [vmem:[#allocation2 + $0x68] sm:$0xff] %v521
      %550 = vst [vmem:[#allocation2 + $0x70] sm:$0xff] %v522
      %551 = vst [vmem:[#allocation2 + $0x78] sm:$0xff] %v523
      %552 = vst [vmem:[#allocation2 + $0x80] sm:$0xff] %v524
      %553 = vst [vmem:[#allocation2 + $0x88] sm:$0xff] %v525
      %554 = vst [vmem:[#allocation2 + $0x90] sm:$0xff] %v526
      %555 = vst [vmem:[#allocation2 + $0x98] sm:$0xff] %v527
      %556 = vst [vmem:[#allocation2 + $0xa0] sm:$0xff] %v528
      %557 = vst [vmem:[#allocation2 + $0xa8] sm:$0xff] %v529
      %558 = vst [vmem:[#allocation2 + $0xb0] sm:$0xff] %v530
      %559 = vst [vmem:[#allocation2 + $0xb8] sm:$0xff] %v531
      %560 = vst [vmem:[#allocation2 + $0xc0] sm:$0xff] %v532
      %561 = vst [vmem:[#allocation2 + $0xc8] sm:$0xff] %v533
      %562 = vst [vmem:[#allocation2 + $0xd0] sm:$0xff] %v534
      %563 = vst [vmem:[#allocation2 + $0xd8] sm:$0xff] %v535
      %v564 = vld [vmem:[#allocation2] ss:$4 sm:$0xff]
      %s565 = scalar_lea.vmem [#allocation2], 32
      %v566 = vld [vmem:[%s565] ss:$4 sm:$0xff]
      %s567 = scalar_lea.vmem [#allocation2], 64
      %v568 = vld [vmem:[%s567] ss:$4 sm:$0xff]
      %s569 = scalar_lea.vmem [#allocation2], 96
      %v570 = vld [vmem:[%s569] ss:$4 sm:$0xff]
      %s571 = scalar_lea.vmem [#allocation2], 128
      %v572 = vld [vmem:[%s571] ss:$4 sm:$0xff]
      %s573 = scalar_lea.vmem [#allocation2], 160
      %v574 = vld [vmem:[%s573] ss:$4 sm:$0xff]
      %s575 = scalar_lea.vmem [#allocation2], 192
      %v576 = vld [vmem:[%s575] ss:$4 sm:$0xff]
      %s577 = scalar_lea.vmem [#allocation2], 1
      %v578 = vld [vmem:[%s577] ss:$4 sm:$0xff]
      %s579 = scalar_lea.vmem [#allocation2], 33
      %v580 = vld [vmem:[%s579] ss:$4 sm:$0xff]
      %s581 = scalar_lea.vmem [#allocation2], 65
      %v582 = vld [vmem:[%s581] ss:$4 sm:$0xff]
      %s583 = scalar_lea.vmem [#allocation2], 97
      %v584 = vld [vmem:[%s583] ss:$4 sm:$0xff]
      %s585 = scalar_lea.vmem [#allocation2], 129
      %v586 = vld [vmem:[%s585] ss:$4 sm:$0xff]
      %s587 = scalar_lea.vmem [#allocation2], 161
      %v588 = vld [vmem:[%s587] ss:$4 sm:$0xff]
      %s589 = scalar_lea.vmem [#allocation2], 193
      %v590 = vld [vmem:[%s589] ss:$4 sm:$0xff]
      %v591 = vmax.f32 %v564, %v578
      %v592 = vmax.f32 %v566, %v580
      %v593 = vmax.f32 %v568, %v582
      %v594 = vmax.f32 %v570, %v584
      %v595 = vmax.f32 %v572, %v586
      %v596 = vmax.f32 %v574, %v588
      %v597 = vmax.f32 %v576, %v590
      %s598 = scalar_lea.vmem [#allocation2], 2
      %v599 = vld [vmem:[%s598] ss:$4 sm:$0xff]
      %s600 = scalar_lea.vmem [#allocation2], 34
      %v601 = vld [vmem:[%s600] ss:$4 sm:$0xff]
      %s602 = scalar_lea.vmem [#allocation2], 66
      %v603 = vld [vmem:[%s602] ss:$4 sm:$0xff]
      %s604 = scalar_lea.vmem [#allocation2], 98
      %v605 = vld [vmem:[%s604] ss:$4 sm:$0xff]
      %s606 = scalar_lea.vmem [#allocation2], 130
      %v607 = vld [vmem:[%s606] ss:$4 sm:$0xff]
      %s608 = scalar_lea.vmem [#allocation2], 162
      %v609 = vld [vmem:[%s608] ss:$4 sm:$0xff]
      %s610 = scalar_lea.vmem [#allocation2], 194
      %v611 = vld [vmem:[%s610] ss:$4 sm:$0xff]
      %v612 = vmax.f32 %v591, %v599
      %v613 = vmax.f32 %v592, %v601
      %v614 = vmax.f32 %v593, %v603
      %v615 = vmax.f32 %v594, %v605
      %v616 = vmax.f32 %v595, %v607
      %v617 = vmax.f32 %v596, %v609
      %v618 = vmax.f32 %v597, %v611
      %s619 = scalar_lea.vmem [#allocation2], 3
      %v620 = vld [vmem:[%s619] ss:$4 sm:$0xff]
      %s621 = scalar_lea.vmem [#allocation2], 35
      %v622 = vld [vmem:[%s621] ss:$4 sm:$0xff]
      %s623 = scalar_lea.vmem [#allocation2], 67
      %v624 = vld [vmem:[%s623] ss:$4 sm:$0xff]
      %s625 = scalar_lea.vmem [#allocation2], 99
      %v626 = vld [vmem:[%s625] ss:$4 sm:$0xff]
      %s627 = scalar_lea.vmem [#allocation2], 131
      %v628 = vld [vmem:[%s627] ss:$4 sm:$0xff]
      %s629 = scalar_lea.vmem [#allocation2], 163
      %v630 = vld [vmem:[%s629] ss:$4 sm:$0xff]
      %s631 = scalar_lea.vmem [#allocation2], 195
      %v632 = vld [vmem:[%s631] ss:$4 sm:$0xff]
      %v633 = vmax.f32 %v612, %v620
      %v634 = vmax.f32 %v613, %v622
      %v635 = vmax.f32 %v614, %v624
      %v636 = vmax.f32 %v615, %v626
      %v637 = vmax.f32 %v616, %v628
      %v638 = vmax.f32 %v617, %v630
      %v639 = vmax.f32 %v618, %v632
      %640 = vst [vmem:[%s172] sm:$0xff] %v633
      %641 = vst [vmem:[%s172 + $0x8] sm:$0xff] %v634
      %642 = vst [vmem:[%s172 + $0x10] sm:$0xff] %v635
      %643 = vst [vmem:[%s172 + $0x18] sm:$0xff] %v636
      %644 = vst [vmem:[%s172 + $0x20] sm:$0xff] %v637
      %645 = vst [vmem:[%s172 + $0x28] sm:$0xff] %v638
      %646 = vst [vmem:[%s172 + $0x30] sm:$0xff] %v639
      %s647 = smul.u32 7, %s14
      %p648 = scmp.lt.s32.totalorder %s647, 13
      %s649 = scalar_select %p648, %s647, 13
      %s650 = smul.addr %s649, 8
      %s651 = scalar_lea.vmem %s3, %s650
      // Predicated region
      $region33: #{_conv2d_block_impl.1} parent=31 // pred_check
        %p652 = pneg %p100
      $region34: #{_conv2d_block_impl.1} parent=31 // pred_check_branch
        %654 = sbr.rel (%p652) target = $region36
      $region35: #{_conv2d_block_impl.1} parent=31 // pred_region
        %s655 = smul.u32 7, %s14
      $region36: #{_conv2d_block_impl.1} parent=31 // pred_fallthru
        _
    $region32: #{_conv2d_block_impl.1} parent=5 // pred_fallthru
      _
    %p656 = scmp.le.s32.totalorder 2, %s9
    // Predicated region
    $region37: #{_conv2d_block_impl.1} parent=5 // pred_check
      %p657 = pneg %p656
    $region38: #{_conv2d_block_impl.1} parent=5 // pred_check_branch
      %659 = sbr.rel (%p657) target = $region40
    $region39: #{_conv2d_block_impl.1} parent=5 // pred_region
      %s660 = ssub.s32 %s9, 2
      // Predicated region
      $region41: #{_conv2d_block_impl.1} parent=39 // pred_check
        %p661 = pneg %p106
      $region42: #{_conv2d_block_impl.1} parent=39 // pred_check_branch
        %663 = sbr.rel (%p661) target = $region44
      $region43: #{_conv2d_block_impl.1} parent=39 // pred_region
        %s664 = smul.u32 7, %s15
        %p665 = scmp.lt.s32.totalorder %s664, 13
        %s666 = scalar_select %p665, %s664, 13
        %s667 = smul.addr %s666, 8
        %s668 = scalar_lea.vmem %s3, %s667
      $region44: #{_conv2d_block_impl.1} parent=39 // pred_fallthru
        _
    $region40: #{_conv2d_block_impl.1} parent=5 // pred_fallthru
      _
  $region6: #{_conv2d_block_impl.1} parent=0 // loop_footer
    %s13 = sadd.s32 1, %s9
  $region7: #{_conv2d_block_impl.1} parent=0 // loop_footer_branch
    %8 = sbr.rel target = $region3
  $region8: #{_conv2d_block_impl.1} parent=0 // loop_exit
    _

</llo_original>
